<compile_context>
chip_gen: v7x
topology: tpu7x:2x2x1
jax: 0.10.0
libtpu: 0.0.40
codegen_flags: <defaults>
</compile_context>

<pallas_src>
import math
import functools

import jax
import jax.numpy as jnp
from jax.experimental import pallas as pl
from jax.experimental.pallas import tpu as pltpu


# ----------------------------- Pallas kernel ------------------------------ #

def _dcn_kernel(v00_ref, v01_ref, v10_ref, v11_ref,
                wy0_ref, wy1_ref, wx0_ref, wx1_ref,
                wmat_ref, bias_ref, out_ref):
    """v??_ref : (C, K, tm) bf16 -- 4 bilinear corner samples (c-major, k-minor)
       wy?/wx? : (K, tm)   bf16 -- factorized modulated bilinear weights
                                   (mask * sample-valid folded into wy?,
                                    per-corner in-bounds folded per axis)
       wmat_ref: (C_out, C*K) bf16 -- flipped conv weight, GEMM-ready
       bias_ref: (C_out, 1)   f32
       out_ref : (C_out, tm)  f32 -- lane-dense output block
    """
    c, k, tm = v00_ref.shape
    ck = c * k

    wy0 = wy0_ref[...].astype(jnp.float32)
    wy1 = wy1_ref[...].astype(jnp.float32)
    wx0 = wx0_ref[...].astype(jnp.float32)
    wx1 = wx1_ref[...].astype(jnp.float32)

    # 4 modulated bilinear corner weights, (1, K, tm); the C_in broadcast
    # happens inside the multiplies below, never materialized at (CK, tm).
    w00 = (wy0 * wx0)[None]
    w01 = (wy0 * wx1)[None]
    w10 = (wy1 * wx0)[None]
    w11 = (wy1 * wx1)[None]

    # Init from the first corner (no zero-fill pass), accumulate in f32.
    cols = v00_ref[...].astype(jnp.float32) * w00
    cols = cols + v01_ref[...].astype(jnp.float32) * w01
    cols = cols + v10_ref[...].astype(jnp.float32) * w10
    cols = cols + v11_ref[...].astype(jnp.float32) * w11

    # (C, K, tm) -> (CK, tm): sublane-split merge, layout-free for K % 8 == 0.
    cols2d = cols.reshape(ck, tm).astype(jnp.bfloat16)

    # Conv-as-GEMM on the MXU (bf16 operands, f32 accumulate) + bias.
    # MXU utilization is irrelevant here -- the kernel is HBM-bound.
    out_ref[...] = (
        jnp.dot(wmat_ref[...], cols2d, preferred_element_type=jnp.float32)
        + bias_ref[...])


def _pick_tile_m(M, CK, K, C_out, target=1024, vmem_budget=40 * 2 ** 20):
    """Largest 128-multiple column tile <= target that fits the VMEM budget
    (double-buffered bf16 inputs + f32 output + in-kernel f32 temps)."""
    per_col = (2 * (4 * CK * 2 + 4 * K * 2 + C_out * 4)   # double-buffered I/O
               + 12 * CK + 16 * K)                         # kernel f32 temps
    cap = max(128, (vmem_budget // per_col) // 128 * 128)
    m_pad = ((M + 127) // 128) * 128
    target = max(128, (target // 128) * 128)
    return int(min(target, cap, m_pad))


def _pallas_dcn(vals, wts, wmatT, bias, tile_target=1024):
    """vals: 4x (N, C, K, Mw) bf16; wts: 4x (N, K, Mw) bf16;
       wmatT: (C_out, C*K) bf16; bias: (C_out,) f32.
       Returns (N, C_out, Mw) f32."""
    N, C, K, Mw = vals[0].shape
    CK = C * K
    C_out = wmatT.shape[0]

    tile_m = _pick_tile_m(Mw, CK, K, C_out, tile_target)
    n_tiles = (Mw + tile_m - 1) // tile_m
    Mw_pad = n_tiles * tile_m

    def pad_last(a):
        return jnp.pad(a, [(0, 0)] * (a.ndim - 1) + [(0, Mw_pad - Mw)])

    vals = [pad_last(v) for v in vals]
    wts = [pad_last(w) for w in wts]
    bias2d = bias.reshape(C_out, 1).astype(jnp.float32)

    val_spec = pl.BlockSpec((None, C, K, tile_m), lambda n, i: (n, 0, 0, i))
    wt_spec = pl.BlockSpec((None, K, tile_m), lambda n, i: (n, 0, i))
    wmat_spec = pl.BlockSpec((C_out, CK), lambda n, i: (0, 0))
    bias_spec = pl.BlockSpec((C_out, 1), lambda n, i: (0, 0))
    out_spec = pl.BlockSpec((None, C_out, tile_m), lambda n, i: (n, 0, i))

    flops = 2 * N * Mw_pad * CK * C_out + N * Mw_pad * (8 * CK + 4 * K)
    bytes_accessed = (4 * N * CK * Mw_pad * 2      # corner values (bf16)
                      + 4 * N * K * Mw_pad * 2     # weight factors (bf16)
                      + C_out * CK * 2 + C_out * 4
                      + N * C_out * Mw_pad * 4)    # output (f32)

    out = pl.pallas_call(
        _dcn_kernel,
        out_shape=jax.ShapeDtypeStruct((N, C_out, Mw_pad), jnp.float32),
        grid_spec=pltpu.PrefetchScalarGridSpec(
            num_scalar_prefetch=0,
            grid=(N, n_tiles),
            in_specs=[val_spec] * 4 + [wt_spec] * 4 + [wmat_spec, bias_spec],
            out_specs=out_spec,
        ),
        compiler_params=pltpu.CompilerParams(
            dimension_semantics=("parallel", "parallel"),
            vmem_limit_bytes=48 * 1024 * 1024),
        cost_estimate=pl.CostEstimate(flops=int(flops), transcendentals=0,
                                      bytes_accessed=int(bytes_accessed)),
    )(*vals, *wts, wmatT, bias2d)
    # Padded columns [Mw:Mw_pad] hold bias-only garbage -- must stay sliced off.
    return out[..., :Mw]


def _ref_dcn(vals, wts, wmatT, bias):
    """Pure-JAX reference of the exact same math (shares the bf16 streams)."""
    v00, v01, v10, v11 = [v.astype(jnp.float32) for v in vals]
    wy0, wy1, wx0, wx1 = [w.astype(jnp.float32) for w in wts]
    N, C, K, Mw = v00.shape
    CK = C * K
    w00 = (wy0 * wx0)[:, None]
    w01 = (wy0 * wx1)[:, None]
    w10 = (wy1 * wx0)[:, None]
    w11 = (wy1 * wx1)[:, None]
    cols = v00 * w00 + v01 * w01 + v10 * w10 + v11 * w11      # (N, C, K, Mw)
    cols = cols.reshape(N, CK, Mw).astype(jnp.bfloat16)
    out = jnp.einsum("oc,ncm->nom", wmatT.astype(jnp.float32),
                     cols.astype(jnp.float32))
    return out + bias[None, :, None]


# --------------------------- JAX glue (im2col) ----------------------------- #

def _build_inputs(x, offset, mask, weight):
    """Build batch-major corner-value and factorized-weight streams."""
    N, C, H, W = x.shape
    C_out, C_in_w, kh, kw = weight.shape
    K = kh * kw
    Ho, Wo = offset.shape[2], offset.shape[3]
    Mw = Ho * Wo

    # weight.flip(-1, -2), flattened PyTorch-style: (C_out, C_in*kh*kw).
    w_flip = weight[:, :, ::-1, ::-1]
    wmatT = w_flip.reshape(C_out, C_in_w * K).astype(jnp.bfloat16)

    # Offsets: channel 2*k is dy, 2*k+1 is dx for kernel index k = i*kw + j.
    off = offset.reshape(N, K, 2, Ho, Wo)
    dy, dx = off[:, :, 0], off[:, :, 1]
    i_k = (jnp.arange(K) // kw).astype(jnp.float32)
    j_k = (jnp.arange(K) % kw).astype(jnp.float32)
    base_y = jnp.arange(Ho, dtype=jnp.float32)
    base_x = jnp.arange(Wo, dtype=jnp.float32)
    y = base_y[None, None, :, None] + i_k[None, :, None, None] + dy
    xs = base_x[None, None, None, :] + j_k[None, :, None, None] + dx

    # Sample-level validity (torchvision zeroes samples outside (-1,H)x(-1,W)).
    valid = ((y > -1) & (y < H) & (xs > -1) & (xs < W)).astype(jnp.float32)

    y0 = jnp.floor(y)
    x0 = jnp.floor(xs)
    ly, lx = y - y0, xs - x0
    hy, hx = 1.0 - ly, 1.0 - lx
    y0i = y0.astype(jnp.int32)
    x0i = x0.astype(jnp.int32)
    y1i, x1i = y0i + 1, x0i + 1

    # Factorized corner weights: per-corner weight = wy? * wx?, with
    # mask * sample-valid folded into the y-factors and the per-corner
    # in-bounds predicate folded per axis.  Shipped compact as (N, K, Mw) bf16.
    mod = mask * valid
    wy0 = hy * mod * (y0i >= 0).astype(jnp.float32)
    wy1 = ly * mod * (y1i <= H - 1).astype(jnp.float32)
    wx0 = hx * (x0i >= 0).astype(jnp.float32)
    wx1 = lx * (x1i <= W - 1).astype(jnp.float32)

    def to_wt_stream(a):        # (N, K, Ho, Wo) -> (N, K, Mw) bf16, no transpose
        return a.reshape(N, K, Mw).astype(jnp.bfloat16)

    wts = tuple(to_wt_stream(a) for a in (wy0, wy1, wx0, wx1))

    # TODO(synk): the data-dependent bilinear gather stays in XLA; moving it
    # in-kernel (x resident in VMEM per batch, indices via scalar prefetch)
    # would remove the remaining HBM round-trip of the K*-expanded values.
    x_flat = x.astype(jnp.bfloat16).reshape(N, C, H * W)

    def gather(yi, xi):          # clipped corner fetch; OOB handled via weights
        ycl = jnp.clip(yi, 0, H - 1)
        xcl = jnp.clip(xi, 0, W - 1)
        idx = (ycl * W + xcl).reshape(N, 1, K * Mw)
        idx = jnp.broadcast_to(idx, (N, C, K * Mw))
        v = jnp.take_along_axis(x_flat, idx, axis=2)
        return v.reshape(N, C, K, Mw)          # batch-major, c-major/k-minor

    vals = tuple(gather(yi, xi) for yi, xi in ((y0i, x0i), (y0i, x1i),
                                               (y1i, x0i), (y1i, x1i)))
    return vals, wts, wmatT


def deform_conv_transpose_forward(x, offset, mask, weight, bias,
                                  use_pallas=True):
    """Forward of DeformConvTranspose:
       torchvision.ops.deform_conv2d(x, offset, weight.flip(-1,-2), bias,
                                     mask=mask) with stride=1, padding=0."""
    N = x.shape[0]
    C_out = weight.shape[0]
    Ho, Wo = offset.shape[2], offset.shape[3]

    vals, wts, wmatT = _build_inputs(x, offset, mask, weight)
    if use_pallas:
        out = _pallas_dcn(vals, wts, wmatT, bias)       # (N, C_out, Mw)
    else:
        out = _ref_dcn(vals, wts, wmatT, bias)
    return out.reshape(N, C_out, Ho, Wo)                # NCHW, no transpose


# --------------------------------- main ------------------------------------ #

if __name__ == "__main__":
    key = jax.random.PRNGKey(0)
    N, C_in, C_out, up = 2, 4, 8, 2
    H = W = 16
    kh = kw = 2 * up                 # kernel_size = (up*2, up*2) = (4, 4)
    K = kh * kw
    Ho, Wo = H - kh + 1, W - kw + 1  # deform_conv2d default stride=1, pad=0

    k1, k2, k3, k4, k5 = jax.random.split(key, 5)

    # Deterministic parameter init matching reset_parameters():
    # kaiming_uniform_(a=sqrt(5)) -> U(-1/sqrt(fan_in), 1/sqrt(fan_in)).
    fan_in = C_in * kh * kw
    bound = 1.0 / math.sqrt(fan_in)
    weight = jax.random.uniform(k1, (C_out, C_in, kh, kw), jnp.float32,
                                -bound, bound)
    bias = jax.random.uniform(k2, (C_out,), jnp.float32, -bound, bound)

    x = jax.random.normal(k3, (N, C_in, H, W), jnp.float32)
    offset = jax.random.uniform(k4, (N, 2 * K, Ho, Wo), jnp.float32, -2.0, 2.0)
    mask = jax.nn.sigmoid(jax.random.normal(k5, (N, K, Ho, Wo), jnp.float32))

    fwd = jax.jit(functools.partial(deform_conv_transpose_forward,
                                    use_pallas=True))
    out = jax.block_until_ready(fwd(x, offset, mask, weight, bias))

    # Pure-JAX reference of the same math (shares the bf16 stream prep).
    ref = deform_conv_transpose_forward(x, offset, mask, weight, bias,
                                        use_pallas=False)
    assert out.shape == (N, C_out, Ho, Wo)
    assert bool(jnp.all(jnp.isfinite(out)))
    assert bool(jnp.allclose(out, ref, atol=1e-3, rtol=1e-3))
    print("KERNEL_OK")
</pallas_src>

<mosaic_0001>
module attributes {stable_mosaic.version = 11 : i64} {
  func.func @_dcn_kernel(%arg0: i32, %arg1: i32, %arg2: memref<1x4x16x256xbf16, #tpu.memory_space<vmem>>, %arg3: memref<1x4x16x256xbf16, #tpu.memory_space<vmem>>, %arg4: memref<1x4x16x256xbf16, #tpu.memory_space<vmem>>, %arg5: memref<1x4x16x256xbf16, #tpu.memory_space<vmem>>, %arg6: memref<1x16x256xbf16, #tpu.memory_space<vmem>>, %arg7: memref<1x16x256xbf16, #tpu.memory_space<vmem>>, %arg8: memref<1x16x256xbf16, #tpu.memory_space<vmem>>, %arg9: memref<1x16x256xbf16, #tpu.memory_space<vmem>>, %arg10: memref<8x64xbf16, #tpu.memory_space<vmem>>, %arg11: memref<8x1xf32, #tpu.memory_space<vmem>>, %arg12: memref<1x8x256xf32, #tpu.memory_space<vmem>>) attributes {dimension_semantics = [#tpu.dimension_semantics<parallel>, #tpu.dimension_semantics<parallel>], iteration_bounds = array<i64: 2, 1>, scalar_prefetch = 0 : i64, scratch_operands = 0 : i64, tpu.core_type = #tpu.core_type<tc>, window_params = [{transform_indices = @transform_0, window_bounds = array<i64: 1, 4, 16, 256>}, {transform_indices = @transform_1, window_bounds = array<i64: 1, 4, 16, 256>}, {transform_indices = @transform_2, window_bounds = array<i64: 1, 4, 16, 256>}, {transform_indices = @transform_3, window_bounds = array<i64: 1, 4, 16, 256>}, {transform_indices = @transform_4, window_bounds = array<i64: 1, 16, 256>}, {transform_indices = @transform_5, window_bounds = array<i64: 1, 16, 256>}, {transform_indices = @transform_6, window_bounds = array<i64: 1, 16, 256>}, {transform_indices = @transform_7, window_bounds = array<i64: 1, 16, 256>}, {pipeline_mode = #tpu.pipeline_mode<synchronous>, transform_indices = @transform_8, window_bounds = array<i64: 8, 64>}, {pipeline_mode = #tpu.pipeline_mode<synchronous>, transform_indices = @transform_9, window_bounds = array<i64: 8, 1>}, {transform_indices = @transform_10, window_bounds = array<i64: 1, 8, 256>}]} {
    %c0 = arith.constant 0 : index
    %c0_0 = arith.constant 0 : index
    %c0_1 = arith.constant 0 : index
    %0 = vector.load %arg6[%c0, %c0_0, %c0_1] : memref<1x16x256xbf16, #tpu.memory_space<vmem>>, vector<1x16x256xbf16>
    %1 = vector.shape_cast %0 : vector<1x16x256xbf16> to vector<16x256xbf16>
    %2 = arith.extf %1 : vector<16x256xbf16> to vector<16x256xf32>
    %c0_2 = arith.constant 0 : index
    %c0_3 = arith.constant 0 : index
    %c0_4 = arith.constant 0 : index
    %3 = vector.load %arg7[%c0_2, %c0_3, %c0_4] : memref<1x16x256xbf16, #tpu.memory_space<vmem>>, vector<1x16x256xbf16>
    %4 = vector.shape_cast %3 : vector<1x16x256xbf16> to vector<16x256xbf16>
    %5 = arith.extf %4 : vector<16x256xbf16> to vector<16x256xf32>
    %c0_5 = arith.constant 0 : index
    %c0_6 = arith.constant 0 : index
    %c0_7 = arith.constant 0 : index
    %6 = vector.load %arg8[%c0_5, %c0_6, %c0_7] : memref<1x16x256xbf16, #tpu.memory_space<vmem>>, vector<1x16x256xbf16>
    %7 = vector.shape_cast %6 : vector<1x16x256xbf16> to vector<16x256xbf16>
    %8 = arith.extf %7 : vector<16x256xbf16> to vector<16x256xf32>
    %c0_8 = arith.constant 0 : index
    %c0_9 = arith.constant 0 : index
    %c0_10 = arith.constant 0 : index
    %9 = vector.load %arg9[%c0_8, %c0_9, %c0_10] : memref<1x16x256xbf16, #tpu.memory_space<vmem>>, vector<1x16x256xbf16>
    %10 = vector.shape_cast %9 : vector<1x16x256xbf16> to vector<16x256xbf16>
    %11 = arith.extf %10 : vector<16x256xbf16> to vector<16x256xf32>
    %12 = arith.mulf %2, %8 : vector<16x256xf32>
    %13 = vector.shape_cast %12 : vector<16x256xf32> to vector<1x16x256xf32>
    %14 = arith.mulf %2, %11 : vector<16x256xf32>
    %15 = vector.shape_cast %14 : vector<16x256xf32> to vector<1x16x256xf32>
    %16 = arith.mulf %5, %8 : vector<16x256xf32>
    %17 = vector.shape_cast %16 : vector<16x256xf32> to vector<1x16x256xf32>
    %18 = arith.mulf %5, %11 : vector<16x256xf32>
    %19 = vector.shape_cast %18 : vector<16x256xf32> to vector<1x16x256xf32>
    %c0_11 = arith.constant 0 : index
    %c0_12 = arith.constant 0 : index
    %c0_13 = arith.constant 0 : index
    %c0_14 = arith.constant 0 : index
    %20 = vector.load %arg2[%c0_11, %c0_12, %c0_13, %c0_14] : memref<1x4x16x256xbf16, #tpu.memory_space<vmem>>, vector<1x4x16x256xbf16>
    %21 = vector.shape_cast %20 : vector<1x4x16x256xbf16> to vector<4x16x256xbf16>
    %22 = arith.extf %21 : vector<4x16x256xbf16> to vector<4x16x256xf32>
    %23 = vector.broadcast %13 : vector<1x16x256xf32> to vector<4x16x256xf32>
    %24 = arith.mulf %22, %23 : vector<4x16x256xf32>
    %c0_15 = arith.constant 0 : index
    %c0_16 = arith.constant 0 : index
    %c0_17 = arith.constant 0 : index
    %c0_18 = arith.constant 0 : index
    %25 = vector.load %arg3[%c0_15, %c0_16, %c0_17, %c0_18] : memref<1x4x16x256xbf16, #tpu.memory_space<vmem>>, vector<1x4x16x256xbf16>
    %26 = vector.shape_cast %25 : vector<1x4x16x256xbf16> to vector<4x16x256xbf16>
    %27 = arith.extf %26 : vector<4x16x256xbf16> to vector<4x16x256xf32>
    %28 = vector.broadcast %15 : vector<1x16x256xf32> to vector<4x16x256xf32>
    %29 = arith.mulf %27, %28 : vector<4x16x256xf32>
    %30 = arith.addf %24, %29 : vector<4x16x256xf32>
    %c0_19 = arith.constant 0 : index
    %c0_20 = arith.constant 0 : index
    %c0_21 = arith.constant 0 : index
    %c0_22 = arith.constant 0 : index
    %31 = vector.load %arg4[%c0_19, %c0_20, %c0_21, %c0_22] : memref<1x4x16x256xbf16, #tpu.memory_space<vmem>>, vector<1x4x16x256xbf16>
    %32 = vector.shape_cast %31 : vector<1x4x16x256xbf16> to vector<4x16x256xbf16>
    %33 = arith.extf %32 : vector<4x16x256xbf16> to vector<4x16x256xf32>
    %34 = vector.broadcast %17 : vector<1x16x256xf32> to vector<4x16x256xf32>
    %35 = arith.mulf %33, %34 : vector<4x16x256xf32>
    %36 = arith.addf %30, %35 : vector<4x16x256xf32>
    %c0_23 = arith.constant 0 : index
    %c0_24 = arith.constant 0 : index
    %c0_25 = arith.constant 0 : index
    %c0_26 = arith.constant 0 : index
    %37 = vector.load %arg5[%c0_23, %c0_24, %c0_25, %c0_26] : memref<1x4x16x256xbf16, #tpu.memory_space<vmem>>, vector<1x4x16x256xbf16>
    %38 = vector.shape_cast %37 : vector<1x4x16x256xbf16> to vector<4x16x256xbf16>
    %39 = arith.extf %38 : vector<4x16x256xbf16> to vector<4x16x256xf32>
    %40 = vector.broadcast %19 : vector<1x16x256xf32> to vector<4x16x256xf32>
    %41 = arith.mulf %39, %40 : vector<4x16x256xf32>
    %42 = arith.addf %36, %41 : vector<4x16x256xf32>
    %43 = vector.shape_cast %42 : vector<4x16x256xf32> to vector<64x256xf32>
    %44 = arith.truncf %43 : vector<64x256xf32> to vector<64x256xbf16>
    %c0_27 = arith.constant 0 : index
    %c0_28 = arith.constant 0 : index
    %45 = vector.load %arg10[%c0_27, %c0_28] : memref<8x64xbf16, #tpu.memory_space<vmem>>, vector<8x64xbf16>
    %cst = arith.constant dense<0.000000e+00> : vector<8x256xf32>
    %46 = tpu.matmul %45, %44, %cst {dimension_numbers = #tpu.dot_dimension_numbers<[1], [0], [0], [1], [0, 0, 1, 1], [], []>} : vector<8x64xbf16>, vector<64x256xbf16>, vector<8x256xf32> -> vector<8x256xf32>
    %c0_29 = arith.constant 0 : index
    %c0_30 = arith.constant 0 : index
    %47 = vector.load %arg11[%c0_29, %c0_30] : memref<8x1xf32, #tpu.memory_space<vmem>>, vector<8x1xf32>
    %48 = vector.broadcast %47 : vector<8x1xf32> to vector<8x256xf32>
    %49 = arith.addf %46, %48 : vector<8x256xf32>
    %c0_31 = arith.constant 0 : index
    %c0_32 = arith.constant 0 : index
    %c0_33 = arith.constant 0 : index
    %50 = vector.load %arg12[%c0_31, %c0_32, %c0_33] : memref<1x8x256xf32, #tpu.memory_space<vmem>>, vector<1x8x256xf32>
    %51 = vector.shape_cast %50 : vector<1x8x256xf32> to vector<8x256xf32>
    %52 = vector.shape_cast %49 : vector<8x256xf32> to vector<1x8x256xf32>
    tpu.vector_store %arg12[%c0_31, %c0_32, %c0_33], %52 {strides = array<i32>} : memref<1x8x256xf32, #tpu.memory_space<vmem>>, vector<1x8x256xf32>,
    return
  }
  func.func @transform_0(%arg0: i32, %arg1: i32) -> (i32, i32, i32, i32) {
    %c0_i32 = arith.constant 0 : i32
    %c0_i32_0 = arith.constant 0 : i32
    %c0_i32_1 = arith.constant 0 : i32
    return %arg0, %c0_i32, %c0_i32_0, %arg1 : i32, i32, i32, i32
  }
  func.func @transform_1(%arg0: i32, %arg1: i32) -> (i32, i32, i32, i32) {
    %c0_i32 = arith.constant 0 : i32
    %c0_i32_0 = arith.constant 0 : i32
    %c0_i32_1 = arith.constant 0 : i32
    return %arg0, %c0_i32, %c0_i32_0, %arg1 : i32, i32, i32, i32
  }
  func.func @transform_2(%arg0: i32, %arg1: i32) -> (i32, i32, i32, i32) {
    %c0_i32 = arith.constant 0 : i32
    %c0_i32_0 = arith.constant 0 : i32
    %c0_i32_1 = arith.constant 0 : i32
    return %arg0, %c0_i32, %c0_i32_0, %arg1 : i32, i32, i32, i32
  }
  func.func @transform_3(%arg0: i32, %arg1: i32) -> (i32, i32, i32, i32) {
    %c0_i32 = arith.constant 0 : i32
    %c0_i32_0 = arith.constant 0 : i32
    %c0_i32_1 = arith.constant 0 : i32
    return %arg0, %c0_i32, %c0_i32_0, %arg1 : i32, i32, i32, i32
  }
  func.func @transform_4(%arg0: i32, %arg1: i32) -> (i32, i32, i32) {
    %c0_i32 = arith.constant 0 : i32
    %c0_i32_0 = arith.constant 0 : i32
    return %arg0, %c0_i32, %arg1 : i32, i32, i32
  }
  func.func @transform_5(%arg0: i32, %arg1: i32) -> (i32, i32, i32) {
    %c0_i32 = arith.constant 0 : i32
    %c0_i32_0 = arith.constant 0 : i32
    return %arg0, %c0_i32, %arg1 : i32, i32, i32
  }
  func.func @transform_6(%arg0: i32, %arg1: i32) -> (i32, i32, i32) {
    %c0_i32 = arith.constant 0 : i32
    %c0_i32_0 = arith.constant 0 : i32
    return %arg0, %c0_i32, %arg1 : i32, i32, i32
  }
  func.func @transform_7(%arg0: i32, %arg1: i32) -> (i32, i32, i32) {
    %c0_i32 = arith.constant 0 : i32
    %c0_i32_0 = arith.constant 0 : i32
    return %arg0, %c0_i32, %arg1 : i32, i32, i32
  }
  func.func @transform_8(%arg0: i32, %arg1: i32) -> (i32, i32) {
    %c0_i32 = arith.constant 0 : i32
    %c0_i32_0 = arith.constant 0 : i32
    %c0_i32_1 = arith.constant 0 : i32
    return %c0_i32, %c0_i32_0 : i32, i32
  }
  func.func @transform_9(%arg0: i32, %arg1: i32) -> (i32, i32) {
    %c0_i32 = arith.constant 0 : i32
    %c0_i32_0 = arith.constant 0 : i32
    %c0_i32_1 = arith.constant 0 : i32
    return %c0_i32, %c0_i32_0 : i32, i32
  }
  func.func @transform_10(%arg0: i32, %arg1: i32) -> (i32, i32, i32) {
    %c0_i32 = arith.constant 0 : i32
    %c0_i32_0 = arith.constant 0 : i32
    return %arg0, %c0_i32, %arg1 : i32, i32, i32
  }
}

</mosaic_0001>

<llo_original>
// kernel: deform_conv_transpose_forward.1
$region0: #{deform_conv_transpose_forward.1}
  #allocation0 [shape = 'u32[]', space=smem, size = 0x4, offset = 0x4, fixed_abs, tag = 'smem constant byte address 0x4 - core index']
  #allocation1 [shape = 'u32[144,128]{1,0:T(1,128)}', space=vmem, size = 0x12000, scoped, tag = 'internal scratch']
  %s0 = inlined_call_operand.vmem [shape: bf16[2,4,16,256], index: 0, kind: input, shape index: {}]
  %s1 = inlined_call_operand.vmem [shape: bf16[2,4,16,256], index: 1, kind: input, shape index: {}]
  %s2 = inlined_call_operand.vmem [shape: bf16[2,4,16,256], index: 2, kind: input, shape index: {}]
  %s3 = inlined_call_operand.vmem [shape: bf16[2,4,16,256], index: 3, kind: input, shape index: {}]
  %s4 = inlined_call_operand.vmem [shape: bf16[2,16,256], index: 4, kind: input, shape index: {}]
  %s5 = inlined_call_operand.vmem [shape: bf16[2,16,256], index: 5, kind: input, shape index: {}]
  %s6 = inlined_call_operand.vmem [shape: bf16[2,16,256], index: 6, kind: input, shape index: {}]
  %s7 = inlined_call_operand.vmem [shape: bf16[2,16,256], index: 7, kind: input, shape index: {}]
  %s8 = inlined_call_operand.vmem [shape: bf16[8,64], index: 8, kind: input, shape index: {}]
  %s9 = inlined_call_operand.vmem [shape: f32[8,1], index: 9, kind: input, shape index: {}]
  %s10 = inlined_call_operand.vmem [shape: f32[2,8,256], index: 10, kind: output, shape index: {}]
  %s11 = sld [smem:[#allocation0]]
  $region73: #{deform_conv_transpose_forward.1} parent=0
    _
  %s13 = ssub.s32 1, %s11
  %s14 = scalar_select 0, %s13, %s11
  loop: start=0, step=1, limit=4
  $region2: #{deform_conv_transpose_forward.1} parent=0 // loop_pre_header
    _
  $region3: #{deform_conv_transpose_forward.1} parent=0 // loop_header
    %s16 = sphi 0, %s20
    %p17 = scmp.ge.s32.totalorder %s16, 4
    %s23 = sphi 0, %s35
    %s24 = sphi 0, %s31
    %s25 = sphi 0, %s23
    %s26 = sphi 0, %s24
    %s27 = sphi 0, %s25
    %s28 = sphi 0, %s26
    %s40 = sphi 0, %s42
    %s43 = sphi 0, %s40
    %s44 = sphi 0, %s43
    %s60 = sphi 0, %s44
    %s68 = sphi 0, %s70
    %s71 = sphi 0, %s68
    %s72 = sphi 0, %s71
    %s88 = sphi 0, %s72
    %s96 = sphi 0, %s98
    %s99 = sphi 0, %s96
    %s100 = sphi 0, %s99
    %s116 = sphi 0, %s100
    %s124 = sphi 0, %s126
    %s127 = sphi 0, %s124
    %s128 = sphi 0, %s127
    %s144 = sphi 0, %s128
    %s152 = sphi 0, %s154
    %s155 = sphi 0, %s152
    %s156 = sphi 0, %s155
    %s172 = sphi 0, %s156
    %s180 = sphi 0, %s182
    %s183 = sphi 0, %s180
    %s184 = sphi 0, %s183
    %s200 = sphi 0, %s184
    %s208 = sphi 0, %s210
    %s211 = sphi 0, %s208
    %s212 = sphi 0, %s211
    %s228 = sphi 0, %s212
    %s236 = sphi 0, %s238
    %s239 = sphi 0, %s236
    %s240 = sphi 0, %s239
    %s256 = sphi 0, %s240
    %s260 = sphi 0, %s260
    %s262 = sphi 0, %s260
    %s263 = sphi 0, %s262
    %s277 = sphi 0, %s263
    %s281 = sphi 0, %s281
    %s283 = sphi 0, %s281
    %s284 = sphi 0, %s283
    %s298 = sphi 0, %s284
    %s306 = sphi 0, %s308
    %s309 = sphi 0, %s306
    %s310 = sphi 0, %s309
    %s326 = sphi 0, %s310
  $region4: #{deform_conv_transpose_forward.1} parent=0 // loop_header_branch
    %19 = sbr.rel (%p17) target = $region8
  $region5: #{deform_conv_transpose_forward.1} parent=0 // loop_body
    %s21 = ssub.s32 %s16, 1
    %s22 = ssub.s32 %s16, 2
    %s29 = sadd.s32 1, %s24
    %p30 = scmp.ge.s32.totalorder %s29, 1
    %s31 = scalar_select %p30, 0, %s29
    %s32 = sadd.s32 1, %s23
    %s33 = scalar_select %p30, %s32, %s23
    %p34 = scmp.ge.s32.totalorder %s33, 2
    %s35 = scalar_select %p34, 0, %s33
    %s36 = ssub.s32 %s23, %s35
    %s37 = ssub.s32 %s24, %s31
    %s38 = sor.u32 %s36, %s37
    %p39 = scmp.eq.s32.totalorder %s38, 0
    %s41 = sadd.s32 %s40, 1
    %s42 = scalar_select %p39, %s40, %s41
    %p45 = pneg %p39
    %p46 = scmp.eq.s32.totalorder %s16, 1
    %p47 = por %p45, %p46
    %p48 = scmp.ne.s32.totalorder %s40, %s43
    %p49 = scmp.eq.s32.totalorder %s16, 0
    %p50 = por %p48, %p49
    %p51 = scmp.ne.s32.totalorder %s40, %s43
    %p52 = scmp.eq.s32.totalorder %s21, 1
    %p53 = por %p51, %p52
    %p54 = scmp.ne.s32.totalorder %s43, %s44
    %p55 = scmp.eq.s32.totalorder %s21, 0
    %p56 = por %p54, %p55
    %p57 = scmp.ne.s32.totalorder %s43, %s44
    %p58 = scmp.eq.s32.totalorder %s22, 1
    %p59 = por %p57, %p58
    %p61 = scmp.ne.s32.totalorder %s44, %s60
    %p62 = scmp.eq.s32.totalorder %s22, 0
    %p63 = por %p61, %p62
    %s64 = ssub.s32 %s23, %s35
    %s65 = ssub.s32 %s24, %s31
    %s66 = sor.u32 %s64, %s65
    %p67 = scmp.eq.s32.totalorder %s66, 0
    %s69 = sadd.s32 %s68, 1
    %s70 = scalar_select %p67, %s68, %s69
    %p73 = pneg %p67
    %p74 = scmp.eq.s32.totalorder %s16, 1
    %p75 = por %p73, %p74
    %p76 = scmp.ne.s32.totalorder %s68, %s71
    %p77 = scmp.eq.s32.totalorder %s16, 0
    %p78 = por %p76, %p77
    %p79 = scmp.ne.s32.totalorder %s68, %s71
    %p80 = scmp.eq.s32.totalorder %s21, 1
    %p81 = por %p79, %p80
    %p82 = scmp.ne.s32.totalorder %s71, %s72
    %p83 = scmp.eq.s32.totalorder %s21, 0
    %p84 = por %p82, %p83
    %p85 = scmp.ne.s32.totalorder %s71, %s72
    %p86 = scmp.eq.s32.totalorder %s22, 1
    %p87 = por %p85, %p86
    %p89 = scmp.ne.s32.totalorder %s72, %s88
    %p90 = scmp.eq.s32.totalorder %s22, 0
    %p91 = por %p89, %p90
    %s92 = ssub.s32 %s23, %s35
    %s93 = ssub.s32 %s24, %s31
    %s94 = sor.u32 %s92, %s93
    %p95 = scmp.eq.s32.totalorder %s94, 0
    %s97 = sadd.s32 %s96, 1
    %s98 = scalar_select %p95, %s96, %s97
    %p101 = pneg %p95
    %p102 = scmp.eq.s32.totalorder %s16, 1
    %p103 = por %p101, %p102
    %p104 = scmp.ne.s32.totalorder %s96, %s99
    %p105 = scmp.eq.s32.totalorder %s16, 0
    %p106 = por %p104, %p105
    %p107 = scmp.ne.s32.totalorder %s96, %s99
    %p108 = scmp.eq.s32.totalorder %s21, 1
    %p109 = por %p107, %p108
    %p110 = scmp.ne.s32.totalorder %s99, %s100
    %p111 = scmp.eq.s32.totalorder %s21, 0
    %p112 = por %p110, %p111
    %p113 = scmp.ne.s32.totalorder %s99, %s100
    %p114 = scmp.eq.s32.totalorder %s22, 1
    %p115 = por %p113, %p114
    %p117 = scmp.ne.s32.totalorder %s100, %s116
    %p118 = scmp.eq.s32.totalorder %s22, 0
    %p119 = por %p117, %p118
    %s120 = ssub.s32 %s23, %s35
    %s121 = ssub.s32 %s24, %s31
    %s122 = sor.u32 %s120, %s121
    %p123 = scmp.eq.s32.totalorder %s122, 0
    %s125 = sadd.s32 %s124, 1
    %s126 = scalar_select %p123, %s124, %s125
    %p129 = pneg %p123
    %p130 = scmp.eq.s32.totalorder %s16, 1
    %p131 = por %p129, %p130
    %p132 = scmp.ne.s32.totalorder %s124, %s127
    %p133 = scmp.eq.s32.totalorder %s16, 0
    %p134 = por %p132, %p133
    %p135 = scmp.ne.s32.totalorder %s124, %s127
    %p136 = scmp.eq.s32.totalorder %s21, 1
    %p137 = por %p135, %p136
    %p138 = scmp.ne.s32.totalorder %s127, %s128
    %p139 = scmp.eq.s32.totalorder %s21, 0
    %p140 = por %p138, %p139
    %p141 = scmp.ne.s32.totalorder %s127, %s128
    %p142 = scmp.eq.s32.totalorder %s22, 1
    %p143 = por %p141, %p142
    %p145 = scmp.ne.s32.totalorder %s128, %s144
    %p146 = scmp.eq.s32.totalorder %s22, 0
    %p147 = por %p145, %p146
    %s148 = ssub.s32 %s23, %s35
    %s149 = ssub.s32 %s24, %s31
    %s150 = sor.u32 %s148, %s149
    %p151 = scmp.eq.s32.totalorder %s150, 0
    %s153 = sadd.s32 %s152, 1
    %s154 = scalar_select %p151, %s152, %s153
    %p157 = pneg %p151
    %p158 = scmp.eq.s32.totalorder %s16, 1
    %p159 = por %p157, %p158
    %p160 = scmp.ne.s32.totalorder %s152, %s155
    %p161 = scmp.eq.s32.totalorder %s16, 0
    %p162 = por %p160, %p161
    %p163 = scmp.ne.s32.totalorder %s152, %s155
    %p164 = scmp.eq.s32.totalorder %s21, 1
    %p165 = por %p163, %p164
    %p166 = scmp.ne.s32.totalorder %s155, %s156
    %p167 = scmp.eq.s32.totalorder %s21, 0
    %p168 = por %p166, %p167
    %p169 = scmp.ne.s32.totalorder %s155, %s156
    %p170 = scmp.eq.s32.totalorder %s22, 1
    %p171 = por %p169, %p170
    %p173 = scmp.ne.s32.totalorder %s156, %s172
    %p174 = scmp.eq.s32.totalorder %s22, 0
    %p175 = por %p173, %p174
    %s176 = ssub.s32 %s23, %s35
    %s177 = ssub.s32 %s24, %s31
    %s178 = sor.u32 %s176, %s177
    %p179 = scmp.eq.s32.totalorder %s178, 0
    %s181 = sadd.s32 %s180, 1
    %s182 = scalar_select %p179, %s180, %s181
    %p185 = pneg %p179
    %p186 = scmp.eq.s32.totalorder %s16, 1
    %p187 = por %p185, %p186
    %p188 = scmp.ne.s32.totalorder %s180, %s183
    %p189 = scmp.eq.s32.totalorder %s16, 0
    %p190 = por %p188, %p189
    %p191 = scmp.ne.s32.totalorder %s180, %s183
    %p192 = scmp.eq.s32.totalorder %s21, 1
    %p193 = por %p191, %p192
    %p194 = scmp.ne.s32.totalorder %s183, %s184
    %p195 = scmp.eq.s32.totalorder %s21, 0
    %p196 = por %p194, %p195
    %p197 = scmp.ne.s32.totalorder %s183, %s184
    %p198 = scmp.eq.s32.totalorder %s22, 1
    %p199 = por %p197, %p198
    %p201 = scmp.ne.s32.totalorder %s184, %s200
    %p202 = scmp.eq.s32.totalorder %s22, 0
    %p203 = por %p201, %p202
    %s204 = ssub.s32 %s23, %s35
    %s205 = ssub.s32 %s24, %s31
    %s206 = sor.u32 %s204, %s205
    %p207 = scmp.eq.s32.totalorder %s206, 0
    %s209 = sadd.s32 %s208, 1
    %s210 = scalar_select %p207, %s208, %s209
    %p213 = pneg %p207
    %p214 = scmp.eq.s32.totalorder %s16, 1
    %p215 = por %p213, %p214
    %p216 = scmp.ne.s32.totalorder %s208, %s211
    %p217 = scmp.eq.s32.totalorder %s16, 0
    %p218 = por %p216, %p217
    %p219 = scmp.ne.s32.totalorder %s208, %s211
    %p220 = scmp.eq.s32.totalorder %s21, 1
    %p221 = por %p219, %p220
    %p222 = scmp.ne.s32.totalorder %s211, %s212
    %p223 = scmp.eq.s32.totalorder %s21, 0
    %p224 = por %p222, %p223
    %p225 = scmp.ne.s32.totalorder %s211, %s212
    %p226 = scmp.eq.s32.totalorder %s22, 1
    %p227 = por %p225, %p226
    %p229 = scmp.ne.s32.totalorder %s212, %s228
    %p230 = scmp.eq.s32.totalorder %s22, 0
    %p231 = por %p229, %p230
    %s232 = ssub.s32 %s23, %s35
    %s233 = ssub.s32 %s24, %s31
    %s234 = sor.u32 %s232, %s233
    %p235 = scmp.eq.s32.totalorder %s234, 0
    %s237 = sadd.s32 %s236, 1
    %s238 = scalar_select %p235, %s236, %s237
    %p241 = pneg %p235
    %p242 = scmp.eq.s32.totalorder %s16, 1
    %p243 = por %p241, %p242
    %p244 = scmp.ne.s32.totalorder %s236, %s239
    %p245 = scmp.eq.s32.totalorder %s16, 0
    %p246 = por %p244, %p245
    %p247 = scmp.ne.s32.totalorder %s236, %s239
    %p248 = scmp.eq.s32.totalorder %s21, 1
    %p249 = por %p247, %p248
    %p250 = scmp.ne.s32.totalorder %s239, %s240
    %p251 = scmp.eq.s32.totalorder %s21, 0
    %p252 = por %p250, %p251
    %p253 = scmp.ne.s32.totalorder %s239, %s240
    %p254 = scmp.eq.s32.totalorder %s22, 1
    %p255 = por %p253, %p254
    %p257 = scmp.ne.s32.totalorder %s240, %s256
    %p258 = scmp.eq.s32.totalorder %s22, 0
    %p259 = por %p257, %p258
    %s261 = sadd.s32 %s260, 1
    %p264 = scmp.eq.s32.totalorder %s16, 1
    %p265 = scmp.ne.s32.totalorder %s260, %s262
    %p266 = scmp.eq.s32.totalorder %s16, 0
    %p267 = por %p265, %p266
    %p268 = scmp.ne.s32.totalorder %s260, %s262
    %p269 = scmp.eq.s32.totalorder %s21, 1
    %p270 = por %p268, %p269
    %p271 = scmp.ne.s32.totalorder %s262, %s263
    %p272 = scmp.eq.s32.totalorder %s21, 0
    %p273 = por %p271, %p272
    %p274 = scmp.ne.s32.totalorder %s262, %s263
    %p275 = scmp.eq.s32.totalorder %s22, 1
    %p276 = por %p274, %p275
    %p278 = scmp.ne.s32.totalorder %s263, %s277
    %p279 = scmp.eq.s32.totalorder %s22, 0
    %p280 = por %p278, %p279
    %s282 = sadd.s32 %s281, 1
    %p285 = scmp.eq.s32.totalorder %s16, 1
    %p286 = scmp.ne.s32.totalorder %s281, %s283
    %p287 = scmp.eq.s32.totalorder %s16, 0
    %p288 = por %p286, %p287
    %p289 = scmp.ne.s32.totalorder %s281, %s283
    %p290 = scmp.eq.s32.totalorder %s21, 1
    %p291 = por %p289, %p290
    %p292 = scmp.ne.s32.totalorder %s283, %s284
    %p293 = scmp.eq.s32.totalorder %s21, 0
    %p294 = por %p292, %p293
    %p295 = scmp.ne.s32.totalorder %s283, %s284
    %p296 = scmp.eq.s32.totalorder %s22, 1
    %p297 = por %p295, %p296
    %p299 = scmp.ne.s32.totalorder %s284, %s298
    %p300 = scmp.eq.s32.totalorder %s22, 0
    %p301 = por %p299, %p300
    %s302 = ssub.s32 %s23, %s35
    %s303 = ssub.s32 %s24, %s31
    %s304 = sor.u32 %s302, %s303
    %p305 = scmp.eq.s32.totalorder %s304, 0
    %s307 = sadd.s32 %s306, 1
    %s308 = scalar_select %p305, %s306, %s307
    %p311 = pneg %p305
    %p312 = scmp.eq.s32.totalorder %s16, 1
    %p313 = por %p311, %p312
    %p314 = scmp.ne.s32.totalorder %s306, %s309
    %p315 = scmp.eq.s32.totalorder %s16, 0
    %p316 = por %p314, %p315
    %p317 = scmp.ne.s32.totalorder %s306, %s309
    %p318 = scmp.eq.s32.totalorder %s21, 1
    %p319 = por %p317, %p318
    %p320 = scmp.ne.s32.totalorder %s309, %s310
    %p321 = scmp.eq.s32.totalorder %s21, 0
    %p322 = por %p320, %p321
    %p323 = scmp.ne.s32.totalorder %s309, %s310
    %p324 = scmp.eq.s32.totalorder %s22, 1
    %p325 = por %p323, %p324
    %p327 = scmp.ne.s32.totalorder %s310, %s326
    %p328 = scmp.eq.s32.totalorder %s22, 0
    %p329 = por %p327, %p328
    %p330 = scmp.le.s32.totalorder 1, %s16
    %p331 = scmp.lt.s32.totalorder %s16, 3
    %p332 = pnand %p330, %p331
    %p333 = pneg %p332
    // Predicated region
    $region9: #{deform_conv_transpose_forward.1} parent=5 // pred_check
      _
    $region10: #{deform_conv_transpose_forward.1} parent=5 // pred_check_branch
      %335 = sbr.rel (%p332) target = $region12
    $region11: #{deform_conv_transpose_forward.1} parent=5 // pred_region
      %s336 = ssub.s32 %s16, 1
      // Predicated region
      $region13: #{deform_conv_transpose_forward.1} parent=11 // pred_check
        %p337 = pneg %p273
      $region14: #{deform_conv_transpose_forward.1} parent=11 // pred_check_branch
        %339 = sbr.rel (%p337) target = $region16
      $region15: #{deform_conv_transpose_forward.1} parent=11 // pred_region
        _
      $region16: #{deform_conv_transpose_forward.1} parent=11 // pred_fallthru
        _
      // Predicated region
      $region17: #{deform_conv_transpose_forward.1} parent=11 // pred_check
        %p340 = pneg %p294
      $region18: #{deform_conv_transpose_forward.1} parent=11 // pred_check_branch
        %342 = sbr.rel (%p340) target = $region20
      $region19: #{deform_conv_transpose_forward.1} parent=11 // pred_region
        _
      $region20: #{deform_conv_transpose_forward.1} parent=11 // pred_fallthru
        _
    $region12: #{deform_conv_transpose_forward.1} parent=5 // pred_fallthru
      _
    %p343 = scmp.lt.s32.totalorder %s16, 2
    // Predicated region
    $region21: #{deform_conv_transpose_forward.1} parent=5 // pred_check
      %p344 = pneg %p343
    $region22: #{deform_conv_transpose_forward.1} parent=5 // pred_check_branch
      %346 = sbr.rel (%p344) target = $region24
    $region23: #{deform_conv_transpose_forward.1} parent=5 // pred_region
      // Predicated region
      $region25: #{deform_conv_transpose_forward.1} parent=23 // pred_check
        %p347 = pneg %p50
      $region26: #{deform_conv_transpose_forward.1} parent=23 // pred_check_branch
        %349 = sbr.rel (%p347) target = $region28
      $region27: #{deform_conv_transpose_forward.1} parent=23 // pred_region
        %s350 = smul.u32 2, %s24
        %p351 = scmp.lt.s32.totalorder %s23, 1
        %s352 = scalar_select %p351, %s23, 1
        %p353 = scmp.lt.s32.totalorder %s350, 1
        %s354 = scalar_select %p353, %s350, 1
        %s355 = smul.addr %s352, 16
        %s356 = sadd.s32 %s354, %s355
        %s357 = smul.addr %s356, 4
        %s358 = scalar_lea.vmem %s0, %s357
        %s359 = smul.u32 2, %s24
      $region28: #{deform_conv_transpose_forward.1} parent=23 // pred_fallthru
        _
      // Predicated region
      $region29: #{deform_conv_transpose_forward.1} parent=23 // pred_check
        %p360 = pneg %p78
      $region30: #{deform_conv_transpose_forward.1} parent=23 // pred_check_branch
        %362 = sbr.rel (%p360) target = $region32
      $region31: #{deform_conv_transpose_forward.1} parent=23 // pred_region
        %s363 = smul.u32 2, %s24
        %p364 = scmp.lt.s32.totalorder %s23, 1
        %s365 = scalar_select %p364, %s23, 1
        %p366 = scmp.lt.s32.totalorder %s363, 1
        %s367 = scalar_select %p366, %s363, 1
        %s368 = smul.addr %s365, 16
        %s369 = sadd.s32 %s367, %s368
        %s370 = smul.addr %s369, 4
        %s371 = scalar_lea.vmem %s1, %s370
        %s372 = smul.u32 2, %s24
      $region32: #{deform_conv_transpose_forward.1} parent=23 // pred_fallthru
        _
      // Predicated region
      $region33: #{deform_conv_transpose_forward.1} parent=23 // pred_check
        %p373 = pneg %p106
      $region34: #{deform_conv_transpose_forward.1} parent=23 // pred_check_branch
        %375 = sbr.rel (%p373) target = $region36
      $region35: #{deform_conv_transpose_forward.1} parent=23 // pred_region
        %s376 = smul.u32 2, %s24
        %p377 = scmp.lt.s32.totalorder %s23, 1
        %s378 = scalar_select %p377, %s23, 1
        %p379 = scmp.lt.s32.totalorder %s376, 1
        %s380 = scalar_select %p379, %s376, 1
        %s381 = smul.addr %s378, 16
        %s382 = sadd.s32 %s380, %s381
        %s383 = smul.addr %s382, 4
        %s384 = scalar_lea.vmem %s2, %s383
        %s385 = smul.u32 2, %s24
      $region36: #{deform_conv_transpose_forward.1} parent=23 // pred_fallthru
        _
      // Predicated region
      $region37: #{deform_conv_transpose_forward.1} parent=23 // pred_check
        %p386 = pneg %p134
      $region38: #{deform_conv_transpose_forward.1} parent=23 // pred_check_branch
        %388 = sbr.rel (%p386) target = $region40
      $region39: #{deform_conv_transpose_forward.1} parent=23 // pred_region
        %s389 = smul.u32 2, %s24
        %p390 = scmp.lt.s32.totalorder %s23, 1
        %s391 = scalar_select %p390, %s23, 1
        %p392 = scmp.lt.s32.totalorder %s389, 1
        %s393 = scalar_select %p392, %s389, 1
        %s394 = smul.addr %s391, 16
        %s395 = sadd.s32 %s393, %s394
        %s396 = smul.addr %s395, 4
        %s397 = scalar_lea.vmem %s3, %s396
        %s398 = smul.u32 2, %s24
      $region40: #{deform_conv_transpose_forward.1} parent=23 // pred_fallthru
        _
      // Predicated region
      $region41: #{deform_conv_transpose_forward.1} parent=23 // pred_check
        %p399 = pneg %p162
      $region42: #{deform_conv_transpose_forward.1} parent=23 // pred_check_branch
        %401 = sbr.rel (%p399) target = $region44
      $region43: #{deform_conv_transpose_forward.1} parent=23 // pred_region
        %s402 = smul.u32 2, %s24
        %p403 = scmp.lt.s32.totalorder %s23, 1
        %s404 = scalar_select %p403, %s23, 1
        %p405 = scmp.lt.s32.totalorder %s402, 1
        %s406 = scalar_select %p405, %s402, 1
        %s407 = smul.addr %s404, 4
        %s408 = sadd.s32 %s406, %s407
        %s409 = smul.addr %s408, 4
        %s410 = scalar_lea.vmem %s4, %s409
        %s411 = smul.u32 2, %s24
      $region44: #{deform_conv_transpose_forward.1} parent=23 // pred_fallthru
        _
      // Predicated region
      $region45: #{deform_conv_transpose_forward.1} parent=23 // pred_check
        %p412 = pneg %p190
      $region46: #{deform_conv_transpose_forward.1} parent=23 // pred_check_branch
        %414 = sbr.rel (%p412) target = $region48
      $region47: #{deform_conv_transpose_forward.1} parent=23 // pred_region
        %s415 = smul.u32 2, %s24
        %p416 = scmp.lt.s32.totalorder %s23, 1
        %s417 = scalar_select %p416, %s23, 1
        %p418 = scmp.lt.s32.totalorder %s415, 1
        %s419 = scalar_select %p418, %s415, 1
        %s420 = smul.addr %s417, 4
        %s421 = sadd.s32 %s419, %s420
        %s422 = smul.addr %s421, 4
        %s423 = scalar_lea.vmem %s5, %s422
        %s424 = smul.u32 2, %s24
      $region48: #{deform_conv_transpose_forward.1} parent=23 // pred_fallthru
        _
      // Predicated region
      $region49: #{deform_conv_transpose_forward.1} parent=23 // pred_check
        %p425 = pneg %p218
      $region50: #{deform_conv_transpose_forward.1} parent=23 // pred_check_branch
        %427 = sbr.rel (%p425) target = $region52
      $region51: #{deform_conv_transpose_forward.1} parent=23 // pred_region
        %s428 = smul.u32 2, %s24
        %p429 = scmp.lt.s32.totalorder %s23, 1
        %s430 = scalar_select %p429, %s23, 1
        %p431 = scmp.lt.s32.totalorder %s428, 1
        %s432 = scalar_select %p431, %s428, 1
        %s433 = smul.addr %s430, 4
        %s434 = sadd.s32 %s432, %s433
        %s435 = smul.addr %s434, 4
        %s436 = scalar_lea.vmem %s6, %s435
        %s437 = smul.u32 2, %s24
      $region52: #{deform_conv_transpose_forward.1} parent=23 // pred_fallthru
        _
      // Predicated region
      $region53: #{deform_conv_transpose_forward.1} parent=23 // pred_check
        %p438 = pneg %p246
      $region54: #{deform_conv_transpose_forward.1} parent=23 // pred_check_branch
        %440 = sbr.rel (%p438) target = $region56
      $region55: #{deform_conv_transpose_forward.1} parent=23 // pred_region
        %s441 = smul.u32 2, %s24
        %p442 = scmp.lt.s32.totalorder %s23, 1
        %s443 = scalar_select %p442, %s23, 1
        %p444 = scmp.lt.s32.totalorder %s441, 1
        %s445 = scalar_select %p444, %s441, 1
        %s446 = smul.addr %s443, 4
        %s447 = sadd.s32 %s445, %s446
        %s448 = smul.addr %s447, 4
        %s449 = scalar_lea.vmem %s7, %s448
        %s450 = smul.u32 2, %s24
      $region56: #{deform_conv_transpose_forward.1} parent=23 // pred_fallthru
        _
    $region24: #{deform_conv_transpose_forward.1} parent=5 // pred_fallthru
      _
    %p451 = scmp.le.s32.totalorder 1, %s16
    %p452 = scmp.lt.s32.totalorder %s16, 3
    %p453 = pnand %p451, %p452
    %p454 = pneg %p453
    // Predicated region
    $region57: #{deform_conv_transpose_forward.1} parent=5 // pred_check
      _
    $region58: #{deform_conv_transpose_forward.1} parent=5 // pred_check_branch
      %456 = sbr.rel (%p453) target = $region60
    $region59: #{deform_conv_transpose_forward.1} parent=5 // pred_region
      %s457 = ssub.s32 %s16, 1
      %s458 = smul.u32 2, %s26
      %p459 = scmp.lt.s32.totalorder %s25, 1
      %s460 = scalar_select %p459, %s25, 1
      %p461 = scmp.lt.s32.totalorder %s458, 1
      %s462 = scalar_select %p461, %s458, 1
      %s463 = smul.addr %s460, 16
      %s464 = sadd.s32 %s462, %s463
      %s465 = smul.addr %s464, 4
      %s466 = scalar_lea.vmem %s0, %s465
      %p467 = pneg %p56
      %p468 = pneg %p53
      %s469 = smul.u32 2, %s26
      %p470 = scmp.lt.s32.totalorder %s25, 1
      %s471 = scalar_select %p470, %s25, 1
      %p472 = scmp.lt.s32.totalorder %s469, 1
      %s473 = scalar_select %p472, %s469, 1
      %s474 = smul.addr %s471, 16
      %s475 = sadd.s32 %s473, %s474
      %s476 = smul.addr %s475, 4
      %s477 = scalar_lea.vmem %s1, %s476
      %p478 = pneg %p84
      %p479 = pneg %p81
      %s480 = smul.u32 2, %s26
      %p481 = scmp.lt.s32.totalorder %s25, 1
      %s482 = scalar_select %p481, %s25, 1
      %p483 = scmp.lt.s32.totalorder %s480, 1
      %s484 = scalar_select %p483, %s480, 1
      %s485 = smul.addr %s482, 16
      %s486 = sadd.s32 %s484, %s485
      %s487 = smul.addr %s486, 4
      %s488 = scalar_lea.vmem %s2, %s487
      %p489 = pneg %p112
      %p490 = pneg %p109
      %s491 = smul.u32 2, %s26
      %p492 = scmp.lt.s32.totalorder %s25, 1
      %s493 = scalar_select %p492, %s25, 1
      %p494 = scmp.lt.s32.totalorder %s491, 1
      %s495 = scalar_select %p494, %s491, 1
      %s496 = smul.addr %s493, 16
      %s497 = sadd.s32 %s495, %s496
      %s498 = smul.addr %s497, 4
      %s499 = scalar_lea.vmem %s3, %s498
      %p500 = pneg %p140
      %p501 = pneg %p137
      %s502 = smul.u32 2, %s26
      %p503 = scmp.lt.s32.totalorder %s25, 1
      %s504 = scalar_select %p503, %s25, 1
      %p505 = scmp.lt.s32.totalorder %s502, 1
      %s506 = scalar_select %p505, %s502, 1
      %s507 = smul.addr %s504, 4
      %s508 = sadd.s32 %s506, %s507
      %s509 = smul.addr %s508, 4
      %s510 = scalar_lea.vmem %s4, %s509
      %p511 = pneg %p168
      %p512 = pneg %p165
      %s513 = smul.u32 2, %s26
      %p514 = scmp.lt.s32.totalorder %s25, 1
      %s515 = scalar_select %p514, %s25, 1
      %p516 = scmp.lt.s32.totalorder %s513, 1
      %s517 = scalar_select %p516, %s513, 1
      %s518 = smul.addr %s515, 4
      %s519 = sadd.s32 %s517, %s518
      %s520 = smul.addr %s519, 4
      %s521 = scalar_lea.vmem %s5, %s520
      %p522 = pneg %p196
      %p523 = pneg %p193
      %s524 = smul.u32 2, %s26
      %p525 = scmp.lt.s32.totalorder %s25, 1
      %s526 = scalar_select %p525, %s25, 1
      %p527 = scmp.lt.s32.totalorder %s524, 1
      %s528 = scalar_select %p527, %s524, 1
      %s529 = smul.addr %s526, 4
      %s530 = sadd.s32 %s528, %s529
      %s531 = smul.addr %s530, 4
      %s532 = scalar_lea.vmem %s6, %s531
      %p533 = pneg %p224
      %p534 = pneg %p221
      %s535 = smul.u32 2, %s26
      %p536 = scmp.lt.s32.totalorder %s25, 1
      %s537 = scalar_select %p536, %s25, 1
      %p538 = scmp.lt.s32.totalorder %s535, 1
      %s539 = scalar_select %p538, %s535, 1
      %s540 = smul.addr %s537, 4
      %s541 = sadd.s32 %s539, %s540
      %s542 = smul.addr %s541, 4
      %s543 = scalar_lea.vmem %s7, %s542
      %p544 = pneg %p252
      %p545 = pneg %p249
      %p546 = pneg %p273
      %p547 = pneg %p270
      %p548 = pneg %p294
      %p549 = pneg %p291
      %p550 = pneg %p322
      %p551 = pneg %p319
      %s552 = smul.u32 2, %s26
      %p553 = scmp.lt.s32.totalorder %s25, 1
      %s554 = scalar_select %p553, %s25, 1
      %p555 = scmp.lt.s32.totalorder %s552, 1
      %s556 = scalar_select %p555, %s552, 1
      %s557 = smul.addr %s554, 2
      %s558 = sadd.s32 %s556, %s557
      %s559 = smul.addr %s558, 8
      %s560 = scalar_lea.vmem %s10, %s559
      %s561 = smul.u32 2, %s26
      %p562 = scmp.lt.s32.totalorder %s25, 1
      %s563 = scalar_select %p562, %s25, 1
      %p564 = scmp.lt.s32.totalorder %s561, 1
      %s565 = scalar_select %p564, %s561, 1
      %s566 = smul.addr %s563, 16
      %s567 = sadd.s32 %s565, %s566
      %s568 = smul.addr %s567, 4
      %s569 = scalar_lea.vmem %s0, %s568
      %s570 = smul.u32 2, %s26
      %s571 = smul.u32 2, %s26
      %p572 = scmp.lt.s32.totalorder %s25, 1
      %s573 = scalar_select %p572, %s25, 1
      %p574 = scmp.lt.s32.totalorder %s571, 1
      %s575 = scalar_select %p574, %s571, 1
      %s576 = smul.addr %s573, 16
      %s577 = sadd.s32 %s575, %s576
      %s578 = smul.addr %s577, 4
      %s579 = scalar_lea.vmem %s1, %s578
      %s580 = smul.u32 2, %s26
      %s581 = smul.u32 2, %s26
      %p582 = scmp.lt.s32.totalorder %s25, 1
      %s583 = scalar_select %p582, %s25, 1
      %p584 = scmp.lt.s32.totalorder %s581, 1
      %s585 = scalar_select %p584, %s581, 1
      %s586 = smul.addr %s583, 16
      %s587 = sadd.s32 %s585, %s586
      %s588 = smul.addr %s587, 4
      %s589 = scalar_lea.vmem %s2, %s588
      %s590 = smul.u32 2, %s26
      %s591 = smul.u32 2, %s26
      %p592 = scmp.lt.s32.totalorder %s25, 1
      %s593 = scalar_select %p592, %s25, 1
      %p594 = scmp.lt.s32.totalorder %s591, 1
      %s595 = scalar_select %p594, %s591, 1
      %s596 = smul.addr %s593, 16
      %s597 = sadd.s32 %s595, %s596
      %s598 = smul.addr %s597, 4
      %s599 = scalar_lea.vmem %s3, %s598
      %s600 = smul.u32 2, %s26
      %s601 = smul.u32 2, %s26
      %p602 = scmp.lt.s32.totalorder %s25, 1
      %s603 = scalar_select %p602, %s25, 1
      %p604 = scmp.lt.s32.totalorder %s601, 1
      %s605 = scalar_select %p604, %s601, 1
      %s606 = smul.addr %s603, 4
      %s607 = sadd.s32 %s605, %s606
      %s608 = smul.addr %s607, 4
      %s609 = scalar_lea.vmem %s4, %s608
      %s610 = smul.u32 2, %s26
      %s611 = smul.u32 2, %s26
      %p612 = scmp.lt.s32.totalorder %s25, 1
      %s613 = scalar_select %p612, %s25, 1
      %p614 = scmp.lt.s32.totalorder %s611, 1
      %s615 = scalar_select %p614, %s611, 1
      %s616 = smul.addr %s613, 4
      %s617 = sadd.s32 %s615, %s616
      %s618 = smul.addr %s617, 4
      %s619 = scalar_lea.vmem %s5, %s618
      %s620 = smul.u32 2, %s26
      %s621 = smul.u32 2, %s26
      %p622 = scmp.lt.s32.totalorder %s25, 1
      %s623 = scalar_select %p622, %s25, 1
      %p624 = scmp.lt.s32.totalorder %s621, 1
      %s625 = scalar_select %p624, %s621, 1
      %s626 = smul.addr %s623, 4
      %s627 = sadd.s32 %s625, %s626
      %s628 = smul.addr %s627, 4
      %s629 = scalar_lea.vmem %s6, %s628
      %s630 = smul.u32 2, %s26
      %s631 = smul.u32 2, %s26
      %p632 = scmp.lt.s32.totalorder %s25, 1
      %s633 = scalar_select %p632, %s25, 1
      %p634 = scmp.lt.s32.totalorder %s631, 1
      %s635 = scalar_select %p634, %s631, 1
      %s636 = smul.addr %s633, 4
      %s637 = sadd.s32 %s635, %s636
      %s638 = smul.addr %s637, 4
      %s639 = scalar_lea.vmem %s7, %s638
      %s640 = smul.u32 2, %s26
      %s641 = smul.u32 2, %s26
      %p642 = scmp.lt.s32.totalorder %s25, 1
      %s643 = scalar_select %p642, %s25, 1
      %p644 = scmp.lt.s32.totalorder %s641, 1
      %s645 = scalar_select %p644, %s641, 1
      %s646 = smul.addr %s643, 2
      %s647 = sadd.s32 %s645, %s646
      %s648 = smul.addr %s647, 8
      %s649 = scalar_lea.vmem %s10, %s648
      %s650 = smul.u32 2, %s26
      %v652 = vld [vmem:[%s609] sm:$0xff]
      %v653 = vld [vmem:[%s609 + $0x8] sm:$0xff]
      %v654 = vunpack.c.l.bf16 %v652
      %v655 = vunpack.c.h.bf16 %v652
      %v656 = vunpack.c.l.bf16 %v653
      %v657 = vunpack.c.h.bf16 %v653
      %v658 = vld [vmem:[%s619] sm:$0xff]
      %v659 = vld [vmem:[%s619 + $0x8] sm:$0xff]
      %v660 = vunpack.c.l.bf16 %v658
      %v661 = vunpack.c.h.bf16 %v658
      %v662 = vunpack.c.l.bf16 %v659
      %v663 = vunpack.c.h.bf16 %v659
      %v664 = vld [vmem:[%s629] sm:$0xff]
      %v665 = vld [vmem:[%s629 + $0x8] sm:$0xff]
      %v666 = vunpack.c.l.bf16 %v664
      %v667 = vunpack.c.h.bf16 %v664
      %v668 = vunpack.c.l.bf16 %v665
      %v669 = vunpack.c.h.bf16 %v665
      %v670 = vld [vmem:[%s639] sm:$0xff]
      %v671 = vld [vmem:[%s639 + $0x8] sm:$0xff]
      %v672 = vunpack.c.l.bf16 %v670
      %v673 = vunpack.c.h.bf16 %v670
      %v674 = vunpack.c.l.bf16 %v671
      %v675 = vunpack.c.h.bf16 %v671
      %v676 = vmul.f32 %v654, %v666
      %v677 = vmul.f32 %v655, %v667
      %v678 = vmul.f32 %v656, %v668
      %v679 = vmul.f32 %v657, %v669
      %v680 = vmul.f32 %v654, %v672
      %v681 = vmul.f32 %v655, %v673
      %v682 = vmul.f32 %v656, %v674
      %v683 = vmul.f32 %v657, %v675
      %v684 = vmul.f32 %v660, %v666
      %v685 = vmul.f32 %v661, %v667
      %v686 = vmul.f32 %v662, %v668
      %v687 = vmul.f32 %v663, %v669
      %v688 = vmul.f32 %v660, %v672
      %v689 = vmul.f32 %v661, %v673
      %v690 = vmul.f32 %v662, %v674
      %v691 = vmul.f32 %v663, %v675
      %v692 = vld [vmem:[%s569] sm:$0xff]
      %v693 = vld [vmem:[%s569 + $0x8] sm:$0xff]
      %v694 = vld [vmem:[%s569 + $0x10] sm:$0xff]
      %v695 = vld [vmem:[%s569 + $0x18] sm:$0xff]
      %v696 = vld [vmem:[%s569 + $0x20] sm:$0xff]
      %v697 = vld [vmem:[%s569 + $0x28] sm:$0xff]
      %v698 = vld [vmem:[%s569 + $0x30] sm:$0xff]
      %v699 = vld [vmem:[%s569 + $0x38] sm:$0xff]
      %v700 = vunpack.c.l.bf16 %v692
      %v701 = vunpack.c.h.bf16 %v692
      %v702 = vunpack.c.l.bf16 %v693
      %v703 = vunpack.c.h.bf16 %v693
      %v704 = vunpack.c.l.bf16 %v694
      %v705 = vunpack.c.h.bf16 %v694
      %v706 = vunpack.c.l.bf16 %v695
      %v707 = vunpack.c.h.bf16 %v695
      %v708 = vunpack.c.l.bf16 %v696
      %v709 = vunpack.c.h.bf16 %v696
      %v710 = vunpack.c.l.bf16 %v697
      %v711 = vunpack.c.h.bf16 %v697
      %v712 = vunpack.c.l.bf16 %v698
      %v713 = vunpack.c.h.bf16 %v698
      %v714 = vunpack.c.l.bf16 %v699
      %v715 = vunpack.c.h.bf16 %v699
      %v716 = vmul.f32 %v700, %v676
      %v717 = vmul.f32 %v701, %v677
      %v718 = vmul.f32 %v702, %v678
      %v719 = vmul.f32 %v703, %v679
      %v720 = vmul.f32 %v704, %v676
      %v721 = vmul.f32 %v705, %v677
      %v722 = vmul.f32 %v706, %v678
      %v723 = vmul.f32 %v707, %v679
      %v724 = vmul.f32 %v708, %v676
      %v725 = vmul.f32 %v709, %v677
      %v726 = vmul.f32 %v710, %v678
      %v727 = vmul.f32 %v711, %v679
      %v728 = vmul.f32 %v712, %v676
      %v729 = vmul.f32 %v713, %v677
      %v730 = vmul.f32 %v714, %v678
      %v731 = vmul.f32 %v715, %v679
      %v732 = vld [vmem:[%s579] sm:$0xff]
      %v733 = vld [vmem:[%s579 + $0x8] sm:$0xff]
      %v734 = vld [vmem:[%s579 + $0x10] sm:$0xff]
      %v735 = vld [vmem:[%s579 + $0x18] sm:$0xff]
      %v736 = vld [vmem:[%s579 + $0x20] sm:$0xff]
      %v737 = vld [vmem:[%s579 + $0x28] sm:$0xff]
      %v738 = vld [vmem:[%s579 + $0x30] sm:$0xff]
      %v739 = vld [vmem:[%s579 + $0x38] sm:$0xff]
      %v740 = vunpack.c.l.bf16 %v732
      %v741 = vunpack.c.h.bf16 %v732
      %v742 = vunpack.c.l.bf16 %v733
      %v743 = vunpack.c.h.bf16 %v733
      %v744 = vunpack.c.l.bf16 %v734
      %v745 = vunpack.c.h.bf16 %v734
      %v746 = vunpack.c.l.bf16 %v735
      %v747 = vunpack.c.h.bf16 %v735
      %v748 = vunpack.c.l.bf16 %v736
      %v749 = vunpack.c.h.bf16 %v736
      %v750 = vunpack.c.l.bf16 %v737
      %v751 = vunpack.c.h.bf16 %v737
      %v752 = vunpack.c.l.bf16 %v738
      %v753 = vunpack.c.h.bf16 %v738
      %v754 = vunpack.c.l.bf16 %v739
      %v755 = vunpack.c.h.bf16 %v739
      %v756 = vmul.f32 %v740, %v680
      %v757 = vmul.f32 %v741, %v681
      %v758 = vmul.f32 %v742, %v682
      %v759 = vmul.f32 %v743, %v683
      %v760 = vmul.f32 %v744, %v680
      %v761 = vmul.f32 %v745, %v681
      %v762 = vmul.f32 %v746, %v682
      %v763 = vmul.f32 %v747, %v683
      %v764 = vmul.f32 %v748, %v680
      %v765 = vmul.f32 %v749, %v681
      %v766 = vmul.f32 %v750, %v682
      %v767 = vmul.f32 %v751, %v683
      %v768 = vmul.f32 %v752, %v680
      %v769 = vmul.f32 %v753, %v681
      %v770 = vmul.f32 %v754, %v682
      %v771 = vmul.f32 %v755, %v683
      %v772 = vadd.f32 %v716, %v756
      %v773 = vadd.f32 %v717, %v757
      %v774 = vadd.f32 %v718, %v758
      %v775 = vadd.f32 %v719, %v759
      %v776 = vadd.f32 %v720, %v760
      %v777 = vadd.f32 %v721, %v761
      %v778 = vadd.f32 %v722, %v762
      %v779 = vadd.f32 %v723, %v763
      %v780 = vadd.f32 %v724, %v764
      %v781 = vadd.f32 %v725, %v765
      %v782 = vadd.f32 %v726, %v766
      %v783 = vadd.f32 %v727, %v767
      %v784 = vadd.f32 %v728, %v768
      %v785 = vadd.f32 %v729, %v769
      %v786 = vadd.f32 %v730, %v770
      %v787 = vadd.f32 %v731, %v771
      %v788 = vld [vmem:[%s589] sm:$0xff]
      %v789 = vld [vmem:[%s589 + $0x8] sm:$0xff]
      %v790 = vld [vmem:[%s589 + $0x10] sm:$0xff]
      %v791 = vld [vmem:[%s589 + $0x18] sm:$0xff]
      %v792 = vld [vmem:[%s589 + $0x20] sm:$0xff]
      %v793 = vld [vmem:[%s589 + $0x28] sm:$0xff]
      %v794 = vld [vmem:[%s589 + $0x30] sm:$0xff]
      %v795 = vld [vmem:[%s589 + $0x38] sm:$0xff]
      %v796 = vunpack.c.l.bf16 %v788
      %v797 = vunpack.c.h.bf16 %v788
      %v798 = vunpack.c.l.bf16 %v789
      %v799 = vunpack.c.h.bf16 %v789
      %v800 = vunpack.c.l.bf16 %v790
      %v801 = vunpack.c.h.bf16 %v790
      %v802 = vunpack.c.l.bf16 %v791
      %v803 = vunpack.c.h.bf16 %v791
      %v804 = vunpack.c.l.bf16 %v792
      %v805 = vunpack.c.h.bf16 %v792
      %v806 = vunpack.c.l.bf16 %v793
      %v807 = vunpack.c.h.bf16 %v793
      %v808 = vunpack.c.l.bf16 %v794
      %v809 = vunpack.c.h.bf16 %v794
      %v810 = vunpack.c.l.bf16 %v795
      %v811 = vunpack.c.h.bf16 %v795
      %v812 = vmul.f32 %v796, %v684
      %v813 = vmul.f32 %v797, %v685
      %v814 = vmul.f32 %v798, %v686
      %v815 = vmul.f32 %v799, %v687
      %v816 = vmul.f32 %v800, %v684
      %v817 = vmul.f32 %v801, %v685
      %v818 = vmul.f32 %v802, %v686
      %v819 = vmul.f32 %v803, %v687
      %v820 = vmul.f32 %v804, %v684
      %v821 = vmul.f32 %v805, %v685
      %v822 = vmul.f32 %v806, %v686
      %v823 = vmul.f32 %v807, %v687
      %v824 = vmul.f32 %v808, %v684
      %v825 = vmul.f32 %v809, %v685
      %v826 = vmul.f32 %v810, %v686
      %v827 = vmul.f32 %v811, %v687
      %v828 = vadd.f32 %v772, %v812
      %v829 = vadd.f32 %v773, %v813
      %v830 = vadd.f32 %v774, %v814
      %v831 = vadd.f32 %v775, %v815
      %v832 = vadd.f32 %v776, %v816
      %v833 = vadd.f32 %v777, %v817
      %v834 = vadd.f32 %v778, %v818
      %v835 = vadd.f32 %v779, %v819
      %v836 = vadd.f32 %v780, %v820
      %v837 = vadd.f32 %v781, %v821
      %v838 = vadd.f32 %v782, %v822
      %v839 = vadd.f32 %v783, %v823
      %v840 = vadd.f32 %v784, %v824
      %v841 = vadd.f32 %v785, %v825
      %v842 = vadd.f32 %v786, %v826
      %v843 = vadd.f32 %v787, %v827
      %v844 = vld [vmem:[%s599] sm:$0xff]
      %v845 = vld [vmem:[%s599 + $0x8] sm:$0xff]
      %v846 = vld [vmem:[%s599 + $0x10] sm:$0xff]
      %v847 = vld [vmem:[%s599 + $0x18] sm:$0xff]
      %v848 = vld [vmem:[%s599 + $0x20] sm:$0xff]
      %v849 = vld [vmem:[%s599 + $0x28] sm:$0xff]
      %v850 = vld [vmem:[%s599 + $0x30] sm:$0xff]
      %v851 = vld [vmem:[%s599 + $0x38] sm:$0xff]
      %v852 = vunpack.c.l.bf16 %v844
      %v853 = vunpack.c.h.bf16 %v844
      %v854 = vunpack.c.l.bf16 %v845
      %v855 = vunpack.c.h.bf16 %v845
      %v856 = vunpack.c.l.bf16 %v846
      %v857 = vunpack.c.h.bf16 %v846
      %v858 = vunpack.c.l.bf16 %v847
      %v859 = vunpack.c.h.bf16 %v847
      %v860 = vunpack.c.l.bf16 %v848
      %v861 = vunpack.c.h.bf16 %v848
      %v862 = vunpack.c.l.bf16 %v849
      %v863 = vunpack.c.h.bf16 %v849
      %v864 = vunpack.c.l.bf16 %v850
      %v865 = vunpack.c.h.bf16 %v850
      %v866 = vunpack.c.l.bf16 %v851
      %v867 = vunpack.c.h.bf16 %v851
      %v868 = vmul.f32 %v852, %v688
      %v869 = vmul.f32 %v853, %v689
      %v870 = vmul.f32 %v854, %v690
      %v871 = vmul.f32 %v855, %v691
      %v872 = vmul.f32 %v856, %v688
      %v873 = vmul.f32 %v857, %v689
      %v874 = vmul.f32 %v858, %v690
      %v875 = vmul.f32 %v859, %v691
      %v876 = vmul.f32 %v860, %v688
      %v877 = vmul.f32 %v861, %v689
      %v878 = vmul.f32 %v862, %v690
      %v879 = vmul.f32 %v863, %v691
      %v880 = vmul.f32 %v864, %v688
      %v881 = vmul.f32 %v865, %v689
      %v882 = vmul.f32 %v866, %v690
      %v883 = vmul.f32 %v867, %v691
      %v884 = vadd.f32 %v828, %v868
      %v885 = vadd.f32 %v829, %v869
      %v886 = vadd.f32 %v830, %v870
      %v887 = vadd.f32 %v831, %v871
      %v888 = vadd.f32 %v832, %v872
      %v889 = vadd.f32 %v833, %v873
      %v890 = vadd.f32 %v834, %v874
      %v891 = vadd.f32 %v835, %v875
      %v892 = vadd.f32 %v836, %v876
      %v893 = vadd.f32 %v837, %v877
      %v894 = vadd.f32 %v838, %v878
      %v895 = vadd.f32 %v839, %v879
      %v896 = vadd.f32 %v840, %v880
      %v897 = vadd.f32 %v841, %v881
      %v898 = vadd.f32 %v842, %v882
      %v899 = vadd.f32 %v843, %v883
      %v900 = vpack.c.bf16 %v886, %v884
      %v901 = vpack.c.bf16 %v887, %v885
      %v902 = vpack.c.bf16 %v890, %v888
      %v903 = vpack.c.bf16 %v891, %v889
      %v904 = vpack.c.bf16 %v894, %v892
      %v905 = vpack.c.bf16 %v895, %v893
      %v906 = vpack.c.bf16 %v898, %v896
      %v907 = vpack.c.bf16 %v899, %v897
      %v908 = vld [vmem:[%s8] sm:$0xf]
      %v909 = vld [vmem:[%s9] sm:$0xff]
      %911 = vset.pattern.permute.xlu0 0
      %912 = vperm.xlu0 %911, %v909
      %v913 = vpop.permute.xlu0 %912
      %vm915 = vcmask 523264
      %v917 = vsel %vm915, %v908, 0
      %919 = vmatprep.subr.bf16.mxu0 %v901
      %920 = vmatpush1.bf16.msra.mxu0 %v900
      %921 = vmatprep.subr.bf16.mxu0 %v903
      %922 = vmatpush1.bf16.msra.mxu0 %v902
      %923 = vmatprep.subr.bf16.mxu0 %v905
      %924 = vmatpush1.bf16.msra.mxu0 %v904
      %925 = vmatprep.subr.bf16.mxu0 %v907
      %926 = vmatpush1.bf16.msra.mxu0 %v906
      %927 = vmatprep.subr.bf16.mxu0 0
      %928 = vmatpush1.bf16.msra.mxu0 0
      %929 = vmatprep.subr.bf16.mxu0 0
      %930 = vmatpush1.bf16.msra.mxu0 0
      %931 = vmatprep.subr.bf16.mxu0 0
      %932 = vmatpush1.bf16.msra.mxu0 0
      %933 = vmatprep.subr.bf16.mxu0 0
      %934 = vmatpush1.bf16.msra.mxu0 0
      %935 = vmatprep.subr.bf16.mxu0 0
      %936 = vmatpush1.bf16.msra.mxu0 0
      %937 = vmatprep.subr.bf16.mxu0 0
      %938 = vmatpush1.bf16.msra.mxu0 0
      %939 = vmatprep.subr.bf16.mxu0 0
      %940 = vmatpush1.bf16.msra.mxu0 0
      %941 = vmatprep.subr.bf16.mxu0 0
      %942 = vmatpush1.bf16.msra.mxu0 0
      %943 = vmatprep.subr.bf16.mxu0 0
      %944 = vmatpush1.bf16.msra.mxu0 0
      %945 = vmatprep.subr.bf16.mxu0 0
      %946 = vmatpush1.bf16.msra.mxu0 0
      %947 = vmatprep.subr.bf16.mxu0 0
      %948 = vmatpush1.bf16.msra.mxu0 0
      %949 = vmatprep.subr.bf16.mxu0 0
      %950 = vmatpush1.bf16.msra.mxu0 0
      %951 = vmatprep.mubr.bf16.mxu0 0
      %952 = vmatmul.mubr.bf16.gmra.mrb[0].mxu0 %v917
      %v953 = vpop.f32.mrb[0].mxu0
      %v954 = vadd.f32 %v913, %v953
      %v955 = vpop.f32.mrb[0].mxu0
      %v956 = vadd.f32 %v913, %v955
      %v957 = vpop.f32.mrb[0].mxu0
      %v958 = vpop.f32.mrb[0].mxu0
      %959 = vdwg.mxu0
      %960 = vst [vmem:[%s649] sm:$0xff] %v954
      %961 = vst [vmem:[%s649 + $0x8] sm:$0xff] %v956
      %s962 = smul.u32 2, %s26
      %p963 = scmp.lt.s32.totalorder %s25, 1
      %s964 = scalar_select %p963, %s25, 1
      %p965 = scmp.lt.s32.totalorder %s962, 1
      %s966 = scalar_select %p965, %s962, 1
      %s967 = smul.addr %s964, 2
      %s968 = sadd.s32 %s966, %s967
      %s969 = smul.addr %s968, 8
      %s970 = scalar_lea.vmem %s10, %s969
      // Predicated region
      $region61: #{deform_conv_transpose_forward.1} parent=59 // pred_check
        %p971 = pneg %p319
      $region62: #{deform_conv_transpose_forward.1} parent=59 // pred_check_branch
        %973 = sbr.rel (%p971) target = $region64
      $region63: #{deform_conv_transpose_forward.1} parent=59 // pred_region
        %s974 = smul.u32 2, %s26
      $region64: #{deform_conv_transpose_forward.1} parent=59 // pred_fallthru
        _
    $region60: #{deform_conv_transpose_forward.1} parent=5 // pred_fallthru
      _
    %p975 = scmp.le.s32.totalorder 2, %s16
    // Predicated region
    $region65: #{deform_conv_transpose_forward.1} parent=5 // pred_check
      %p976 = pneg %p975
    $region66: #{deform_conv_transpose_forward.1} parent=5 // pred_check_branch
      %978 = sbr.rel (%p976) target = $region68
    $region67: #{deform_conv_transpose_forward.1} parent=5 // pred_region
      %s979 = ssub.s32 %s16, 2
      // Predicated region
      $region69: #{deform_conv_transpose_forward.1} parent=67 // pred_check
        %p980 = pneg %p325
      $region70: #{deform_conv_transpose_forward.1} parent=67 // pred_check_branch
        %982 = sbr.rel (%p980) target = $region72
      $region71: #{deform_conv_transpose_forward.1} parent=67 // pred_region
        %s983 = smul.u32 2, %s28
        %p984 = scmp.lt.s32.totalorder %s27, 1
        %s985 = scalar_select %p984, %s27, 1
        %p986 = scmp.lt.s32.totalorder %s983, 1
        %s987 = scalar_select %p986, %s983, 1
        %s988 = smul.addr %s985, 2
        %s989 = sadd.s32 %s987, %s988
        %s990 = smul.addr %s989, 8
        %s991 = scalar_lea.vmem %s10, %s990
      $region72: #{deform_conv_transpose_forward.1} parent=67 // pred_fallthru
        _
    $region68: #{deform_conv_transpose_forward.1} parent=5 // pred_fallthru
      _
  $region6: #{deform_conv_transpose_forward.1} parent=0 // loop_footer
    %s20 = sadd.s32 1, %s16
  $region7: #{deform_conv_transpose_forward.1} parent=0 // loop_footer_branch
    %15 = sbr.rel target = $region3
  $region8: #{deform_conv_transpose_forward.1} parent=0 // loop_exit
    _

</llo_original>
